<compile_context>
chip_gen: v7x
topology: tpu7x:2x2x1
jax: 0.10.0
libtpu: 0.0.40
codegen_flags: <defaults>
</compile_context>

<pallas_src>
import functools

import jax
import jax.numpy as jnp
from jax.experimental import pallas as pl
from jax.experimental.pallas import tpu as pltpu


def _round_up(x, m):
    return ((x + m - 1) // m) * m


def _set_encoder_kernel(*refs, in_rows, n_per_set, tile_sets,
                        num_hidden_layers, lane_dim, pool_mode):
    """One grid step processes `tile_sets` sets (= tile_sets * n_per_set rows).

    refs (inputs then output):
      x_ref   : [tile_sets*n_per_set, in_rows]   merged (context_x|context_y),
                zero-padded to in_rows columns, compute dtype
      w_ref   : [in_rows + (num_hidden_layers+1)*lane_dim, lane_dim]
                packed / pre-transposed / zero-padded weights (VMEM-resident)
      b_ref   : [num_hidden_layers + 2, lane_dim]  packed biases, f32
      pool_ref: [tile_sets, rows]  block-diagonal ones (only when pool_mode=="pool")
      out_ref : [tile_sets, lane_dim]
    """
    if pool_mode == "pool":
        x_ref, w_ref, b_ref, pool_ref, out_ref = refs
    else:
        x_ref, w_ref, b_ref, out_ref = refs
        pool_ref = None

    compute_dtype = w_ref.dtype
    num_linear = num_hidden_layers + 2
    b_all = b_ref[...]                                   # tiny [L, lane_dim], f32

    # ---- layer 0: [rows, in_rows] @ [in_rows, lane_dim]; K is tiny + zero-padded
    h = jnp.dot(x_ref[...], w_ref[0:in_rows, :],
                preferred_element_type=jnp.float32) + b_all[0:1, :]
    h = jnp.maximum(h, 0.0)

    # ---- hidden layers (MXU, lane-dense 128-wide tiles; bf16 operands, f32 acc)
    off = in_rows
    for i in range(num_hidden_layers):
        h = jnp.dot(h.astype(compute_dtype), w_ref[off:off + lane_dim, :],
                    preferred_element_type=jnp.float32) + b_all[i + 1:i + 2, :]
        h = jnp.maximum(h, 0.0)
        off += lane_dim

    # ---- per-set mean, hoisted before the activation-free final linear ----
    if pool_mode == "pool":
        # Fallback for N % 8 != 0: block-diagonal ones (precomputed in wrapper),
        # sum via MXU then scale by 1/N in f32.
        h_sum = jnp.dot(pool_ref[...], h.astype(compute_dtype),
                        preferred_element_type=jnp.float32)
        h_mean = h_sum * jnp.float32(1.0 / n_per_set)
    elif pool_mode == "full":
        # Single set in this step: plain sublane reduce over all rows.
        h_mean = jnp.mean(h, axis=0, keepdims=True)
    else:  # "reshape": N % 8 == 0 -> sublane-local reduce, no pool matmul
        h_mean = jnp.mean(h.reshape(tile_sets, n_per_set, lane_dim), axis=1)

    # ---- final linear on the reduced [tile_sets, lane] activations ----
    out_ref[...] = (jnp.dot(h_mean.astype(compute_dtype),
                            w_ref[off:off + lane_dim, :],
                            preferred_element_type=jnp.float32)
                    + b_all[num_linear - 1:num_linear, :])


def pack_set_encoder_params(weights, biases, compute_dtype=jnp.bfloat16):
    """Transpose / zero-pad / pack PyTorch-layout params ONCE (outside hot path).

    weights[i]: [out_i, in_i], biases[i]: [out_i].
    Returns (w_packed [R, C] in compute_dtype, b_packed [L, C] in f32) with C a
    multiple of 128 so every matmul and the output store are lane-dense; the
    padding is zeros, so padded columns stay exactly zero through the network.
    """
    in_features = weights[0].shape[1]
    hidden = weights[0].shape[0]
    out_features = weights[-1].shape[0]
    C = _round_up(max(hidden, out_features), 128)
    r0 = _round_up(in_features, 8)

    w0t = jnp.asarray(weights[0], jnp.float32).T                      # [in, hidden]
    blocks = [jnp.pad(w0t, ((0, r0 - w0t.shape[0]), (0, C - w0t.shape[1])))]
    for w in weights[1:]:
        wt = jnp.asarray(w, jnp.float32).T                            # [in_i, out_i]
        blocks.append(jnp.pad(wt, ((0, C - wt.shape[0]), (0, C - wt.shape[1]))))
    w_packed = jnp.concatenate(blocks, axis=0).astype(compute_dtype)

    b_packed = jnp.stack(
        [jnp.pad(jnp.asarray(b, jnp.float32), (0, C - b.shape[0])) for b in biases])
    return w_packed, b_packed


def _prefer_multi_step():
    # v7x has 2 TensorCores: want >= 2 grid steps so dimension_semantics
    # ("parallel",) shards across them; v5e/v6e (1 TC) want the fewest steps.
    try:
        return "v7" in jax.devices()[0].device_kind.lower()
    except Exception:
        return False


def _choose_tiling(S, N, rows_cap=4096):
    """Pick (tile_sets, S_pad).

    tile_sets is a multiple of 8 that divides S_pad (S zero-padded to a multiple
    of 8), or == S when S < 8 (full-extent block), so the output block never
    needs masked partial stores.  rows_cap bounds rows per grid step (live f32
    activations are rows*128*4 B, well inside VMEM on all generations).
    """
    if S < 8:
        return S, S
    S_pad = _round_up(S, 8)
    max_ts = max(8, (rows_cap // max(N, 1)) // 8 * 8)
    limit = S_pad // 2 if (_prefer_multi_step() and S_pad >= 16) else S_pad
    limit = min(limit, max_ts)
    tile_sets = 8                                        # 8 always divides S_pad
    for d in range(8, limit + 1, 8):
        if S_pad % d == 0:
            tile_sets = d
    return tile_sets, S_pad


def set_encoder_forward_batched(context_x, context_y, w_packed, b_packed, *,
                                out_features, num_hidden_layers, tile_sets=None):
    """context_x: [S, N, Xdim], context_y: [S, N, Ydim] -> [S, out_features]."""
    S, N, xdim = context_x.shape
    ydim = context_y.shape[-1]
    in_features = xdim + ydim
    r0 = _round_up(in_features, 8)
    C = w_packed.shape[-1]
    num_linear = num_hidden_layers + 2
    assert b_packed.shape == (num_linear, C)
    assert w_packed.shape[0] == r0 + (num_hidden_layers + 1) * C
    compute_dtype = w_packed.dtype

    if tile_sets is None:
        tile_sets, S_pad = _choose_tiling(S, N)
    else:
        assert tile_sets == S or tile_sets % 8 == 0, \
            "tile_sets must be a multiple of 8 or equal to S (sublane-aligned store)"
        S_pad = _round_up(S, tile_sets)
    assert S_pad % tile_sets == 0
    rows = tile_sets * N

    # Per-set mean strategy.
    if N % 8 == 0:
        pool_mode = "reshape"          # sublane-local reduce, no extra matmul
    elif tile_sets == 1:
        pool_mode = "full"             # reduce over the whole step
    else:
        pool_mode = "pool"             # precomputed block-diagonal ones

    # Merge + zero-pad + flatten inputs (one DMA stream); padded rows/cols are 0.
    x_merged = jnp.concatenate(
        [context_x.astype(jnp.float32), context_y.astype(jnp.float32)], axis=-1)
    x_flat = x_merged.reshape(S * N, in_features)
    x_flat = jnp.pad(x_flat, ((0, (S_pad - S) * N), (0, r0 - in_features)))
    x_flat = x_flat.astype(compute_dtype)

    extra_inputs, extra_specs = [], []
    if pool_mode == "pool":
        # Built once per call in the wrapper (constant index_map -> VMEM-resident).
        row_idx = jnp.arange(tile_sets)[:, None]
        col_idx = jnp.arange(rows)[None, :]
        pool = ((col_idx >= row_idx * N) &
                (col_idx < (row_idx + 1) * N)).astype(compute_dtype)
        extra_inputs.append(pool)
        extra_specs.append(pl.BlockSpec((tile_sets, rows), lambda i: (0, 0)))

    kernel = functools.partial(
        _set_encoder_kernel, in_rows=r0, n_per_set=N, tile_sets=tile_sets,
        num_hidden_layers=num_hidden_layers, lane_dim=C, pool_mode=pool_mode)

    out = pl.pallas_call(
        kernel,
        out_shape=jax.ShapeDtypeStruct((S_pad, C), jnp.float32),
        grid=(S_pad // tile_sets,),
        in_specs=[
            pl.BlockSpec((rows, r0), lambda i: (i, 0)),
            pl.BlockSpec(w_packed.shape, lambda i: (0, 0)),   # VMEM-resident
            pl.BlockSpec(b_packed.shape, lambda i: (0, 0)),   # VMEM-resident
        ] + extra_specs,
        out_specs=pl.BlockSpec((tile_sets, C), lambda i: (i, 0)),
        compiler_params=pltpu.CompilerParams(
            dimension_semantics=("parallel",)),                # v7x: 2 TCs
    )(x_flat, w_packed, b_packed, *extra_inputs)
    return out[:S, :out_features]


def set_encoder_forward(context_x, context_y, w_packed, b_packed, *,
                        out_features, num_hidden_layers):
    """Original module semantics: context_x [N, Xdim], context_y [N, Ydim] -> [out]."""
    out = set_encoder_forward_batched(
        context_x[None], context_y[None], w_packed, b_packed,
        out_features=out_features, num_hidden_layers=num_hidden_layers)
    return out[0]


def init_set_encoder_params(key, in_features, out_features,
                            num_hidden_layers, hidden_features):
    """Deterministic kaiming-normal (fan_in, relu) weights, torch-style biases."""
    dims = ([in_features] + [hidden_features] * (num_hidden_layers + 1)
            + [out_features])
    weights, biases = [], []
    for i in range(len(dims) - 1):
        fan_in, fan_out = dims[i], dims[i + 1]
        key, kw, kb = jax.random.split(key, 3)
        std = (2.0 / fan_in) ** 0.5                       # kaiming_normal, relu
        w = std * jax.random.normal(kw, (fan_out, fan_in), jnp.float32)
        bound = 1.0 / (fan_in ** 0.5)                     # torch Linear bias init
        b = jax.random.uniform(kb, (fan_out,), jnp.float32, -bound, bound)
        weights.append(w)
        biases.append(b)
    return weights, biases


if __name__ == "__main__":
    # Small shapes consistent with the module: context_x [N,Xdim], context_y [N,Ydim];
    # S independent sets are batched through one pallas_call.
    S, N, Xdim, Ydim = 16, 8, 2, 1
    in_features = Xdim + Ydim
    hidden_features = 32
    out_features = 32
    num_hidden_layers = 2

    key = jax.random.PRNGKey(0)
    key, kx, ky = jax.random.split(key, 3)
    context_x = jax.random.normal(kx, (S, N, Xdim), jnp.float32)
    context_y = jax.random.normal(ky, (S, N, Ydim), jnp.float32)

    weights, biases = init_set_encoder_params(
        key, in_features, out_features, num_hidden_layers, hidden_features)

    # Plain-JAX f32 reference.
    h = jnp.concatenate([context_x, context_y], axis=-1)
    for i, (w, b) in enumerate(zip(weights, biases)):
        h = h @ w.T + b
        if i < len(weights) - 1:
            h = jnp.maximum(h, 0.0)
    ref = h.mean(axis=-2)                                  # [S, out_features]

    # ---- bf16 MXU operands (f32 accumulation) -- the production configuration.
    w_bf16, b_f32 = pack_set_encoder_params(weights, biases, jnp.bfloat16)
    emb = set_encoder_forward_batched(
        context_x, context_y, w_bf16, b_f32,
        out_features=out_features, num_hidden_layers=num_hidden_layers)
    jax.block_until_ready(emb)
    assert emb.shape == (S, out_features)
    assert jnp.allclose(emb, ref, atol=3e-2, rtol=3e-2)    # bf16-operand tolerance

    # ---- f32-packed variant: tight-tolerance check of the kernel itself.
    w_f32, _ = pack_set_encoder_params(weights, biases, jnp.float32)
    emb_f32 = set_encoder_forward_batched(
        context_x, context_y, w_f32, b_f32,
        out_features=out_features, num_hidden_layers=num_hidden_layers)
    jax.block_until_ready(emb_f32)
    assert jnp.allclose(emb_f32, ref, atol=1e-4, rtol=1e-4)

    # ---- Single-set path (exact original module signature / semantics).
    emb0 = set_encoder_forward(
        context_x[0], context_y[0], w_bf16, b_f32,
        out_features=out_features, num_hidden_layers=num_hidden_layers)
    jax.block_until_ready(emb0)
    assert emb0.shape == (out_features,)
    assert jnp.allclose(emb0, ref[0], atol=3e-2, rtol=3e-2)

    print("KERNEL_OK")
</pallas_src>

<mosaic_0001>
module attributes {stable_mosaic.version = 11 : i64} {
  func.func @_set_encoder_kernel(%arg0: i32, %arg1: memref<128x8xbf16, #tpu.memory_space<vmem>>, %arg2: memref<392x128xbf16, #tpu.memory_space<vmem>>, %arg3: memref<4x128xf32, #tpu.memory_space<vmem>>, %arg4: memref<16x128xf32, #tpu.memory_space<vmem>>) attributes {dimension_semantics = [#tpu.dimension_semantics<parallel>], iteration_bounds = array<i64: 1>, scalar_prefetch = 0 : i64, scratch_operands = 0 : i64, tpu.core_type = #tpu.core_type<tc>, window_params = [{transform_indices = @transform_0, window_bounds = array<i64: 128, 8>}, {pipeline_mode = #tpu.pipeline_mode<synchronous>, transform_indices = @transform_1, window_bounds = array<i64: 392, 128>}, {pipeline_mode = #tpu.pipeline_mode<synchronous>, transform_indices = @transform_2, window_bounds = array<i64: 4, 128>}, {transform_indices = @transform_3, window_bounds = array<i64: 16, 128>}]} {
    %c0 = arith.constant 0 : index
    %c0_0 = arith.constant 0 : index
    %0 = vector.load %arg3[%c0, %c0_0] : memref<4x128xf32, #tpu.memory_space<vmem>>, vector<4x128xf32>
    %c0_1 = arith.constant 0 : index
    %c0_2 = arith.constant 0 : index
    %1 = vector.load %arg1[%c0_1, %c0_2] : memref<128x8xbf16, #tpu.memory_space<vmem>>, vector<128x8xbf16>
    %c0_3 = arith.constant 0 : index
    %c0_4 = arith.constant 0 : index
    %2 = vector.load %arg2[%c0_3, %c0_4] : memref<392x128xbf16, #tpu.memory_space<vmem>>, vector<8x128xbf16>
    %cst = arith.constant dense<0.000000e+00> : vector<128x128xf32>
    %3 = tpu.matmul %1, %2, %cst {dimension_numbers = #tpu.dot_dimension_numbers<[1], [0], [0], [1], [0, 0, 1, 1], [], []>} : vector<128x8xbf16>, vector<8x128xbf16>, vector<128x128xf32> -> vector<128x128xf32>
    %4 = vector.extract_strided_slice %0 {offsets = [0, 0], sizes = [1, 128], strides = [1, 1]} : vector<4x128xf32> to vector<1x128xf32>
    %5 = vector.broadcast %4 : vector<1x128xf32> to vector<128x128xf32>
    %6 = arith.addf %3, %5 : vector<128x128xf32>
    %cst_5 = arith.constant 0.000000e+00 : f32
    %7 = vector.broadcast %cst_5 : f32 to vector<128x128xf32>
    %8 = arith.maximumf %6, %7 : vector<128x128xf32>
    %9 = arith.truncf %8 : vector<128x128xf32> to vector<128x128xbf16>
    %c8 = arith.constant 8 : index
    %c0_6 = arith.constant 0 : index
    %10 = vector.load %arg2[%c8, %c0_6] : memref<392x128xbf16, #tpu.memory_space<vmem>>, vector<128x128xbf16>
    %cst_7 = arith.constant dense<0.000000e+00> : vector<128x128xf32>
    %11 = tpu.matmul %9, %10, %cst_7 {dimension_numbers = #tpu.dot_dimension_numbers<[1], [0], [0], [1], [0, 0, 1, 1], [], []>} : vector<128x128xbf16>, vector<128x128xbf16>, vector<128x128xf32> -> vector<128x128xf32>
    %12 = vector.extract_strided_slice %0 {offsets = [1, 0], sizes = [1, 128], strides = [1, 1]} : vector<4x128xf32> to vector<1x128xf32>
    %13 = vector.broadcast %12 : vector<1x128xf32> to vector<128x128xf32>
    %14 = arith.addf %11, %13 : vector<128x128xf32>
    %cst_8 = arith.constant 0.000000e+00 : f32
    %15 = vector.broadcast %cst_8 : f32 to vector<128x128xf32>
    %16 = arith.maximumf %14, %15 : vector<128x128xf32>
    %17 = arith.truncf %16 : vector<128x128xf32> to vector<128x128xbf16>
    %c136 = arith.constant 136 : index
    %c0_9 = arith.constant 0 : index
    %18 = vector.load %arg2[%c136, %c0_9] : memref<392x128xbf16, #tpu.memory_space<vmem>>, vector<128x128xbf16>
    %cst_10 = arith.constant dense<0.000000e+00> : vector<128x128xf32>
    %19 = tpu.matmul %17, %18, %cst_10 {dimension_numbers = #tpu.dot_dimension_numbers<[1], [0], [0], [1], [0, 0, 1, 1], [], []>} : vector<128x128xbf16>, vector<128x128xbf16>, vector<128x128xf32> -> vector<128x128xf32>
    %20 = vector.extract_strided_slice %0 {offsets = [2, 0], sizes = [1, 128], strides = [1, 1]} : vector<4x128xf32> to vector<1x128xf32>
    %21 = vector.broadcast %20 : vector<1x128xf32> to vector<128x128xf32>
    %22 = arith.addf %19, %21 : vector<128x128xf32>
    %cst_11 = arith.constant 0.000000e+00 : f32
    %23 = vector.broadcast %cst_11 : f32 to vector<128x128xf32>
    %24 = arith.maximumf %22, %23 : vector<128x128xf32>
    %25 = vector.shape_cast %24 : vector<128x128xf32> to vector<16x8x128xf32>
    %cst_12 = arith.constant dense<0.000000e+00> : vector<16x128xf32>
    %26 = vector.multi_reduction <add>, %25, %cst_12 [1] : vector<16x8x128xf32> to vector<16x128xf32>
    %cst_13 = arith.constant 8.000000e+00 : f32
    %27 = vector.broadcast %cst_13 : f32 to vector<16x128xf32>
    %28 = arith.divf %26, %27 : vector<16x128xf32>
    %29 = arith.truncf %28 : vector<16x128xf32> to vector<16x128xbf16>
    %c264 = arith.constant 264 : index
    %c0_14 = arith.constant 0 : index
    %30 = vector.load %arg2[%c264, %c0_14] : memref<392x128xbf16, #tpu.memory_space<vmem>>, vector<128x128xbf16>
    %cst_15 = arith.constant dense<0.000000e+00> : vector<16x128xf32>
    %31 = tpu.matmul %29, %30, %cst_15 {dimension_numbers = #tpu.dot_dimension_numbers<[1], [0], [0], [1], [0, 0, 1, 1], [], []>} : vector<16x128xbf16>, vector<128x128xbf16>, vector<16x128xf32> -> vector<16x128xf32>
    %32 = vector.extract_strided_slice %0 {offsets = [3, 0], sizes = [1, 128], strides = [1, 1]} : vector<4x128xf32> to vector<1x128xf32>
    %33 = vector.broadcast %32 : vector<1x128xf32> to vector<16x128xf32>
    %34 = arith.addf %31, %33 : vector<16x128xf32>
    %c0_16 = arith.constant 0 : index
    %c0_17 = arith.constant 0 : index
    %35 = vector.load %arg4[%c0_16, %c0_17] : memref<16x128xf32, #tpu.memory_space<vmem>>, vector<16x128xf32>
    tpu.vector_store %arg4[%c0_16, %c0_17], %34 {strides = array<i32>} : memref<16x128xf32, #tpu.memory_space<vmem>>, vector<16x128xf32>,
    return
  }
  func.func @transform_0(%arg0: i32) -> (i32, i32) {
    %c0_i32 = arith.constant 0 : i32
    %c0_i32_0 = arith.constant 0 : i32
    return %arg0, %c0_i32 : i32, i32
  }
  func.func @transform_1(%arg0: i32) -> (i32, i32) {
    %c0_i32 = arith.constant 0 : i32
    %c0_i32_0 = arith.constant 0 : i32
    %c0_i32_1 = arith.constant 0 : i32
    return %c0_i32, %c0_i32_0 : i32, i32
  }
  func.func @transform_2(%arg0: i32) -> (i32, i32) {
    %c0_i32 = arith.constant 0 : i32
    %c0_i32_0 = arith.constant 0 : i32
    %c0_i32_1 = arith.constant 0 : i32
    return %c0_i32, %c0_i32_0 : i32, i32
  }
  func.func @transform_3(%arg0: i32) -> (i32, i32) {
    %c0_i32 = arith.constant 0 : i32
    %c0_i32_0 = arith.constant 0 : i32
    return %arg0, %c0_i32 : i32, i32
  }
}

</mosaic_0001>

<llo_original>
// kernel: tpu_custom_call.1
$region0: #{tpu_custom_call.1}
  #allocation0 [shape = 'u32[]', space=smem, size = 0x4, offset = 0x4, fixed_abs, tag = 'smem constant byte address 0x4 - core index']
  #allocation1 [shape = 'u32[144,128]{1,0:T(1,128)}', space=vmem, size = 0x12000, scoped, tag = 'internal scratch']
  %s0 = inlined_call_operand.vmem [shape: bf16[128,8], index: 0, kind: input, shape index: {}]
  %s1 = inlined_call_operand.hbm [shape: bf16[392,128], index: 1, kind: input, shape index: {}]
  %s2 = inlined_call_operand.vmem [shape: f32[4,128], index: 2, kind: input, shape index: {}]
  %s3 = inlined_call_operand.hbm [shape: f32[16,128], index: 3, kind: output, shape index: {}]
  %s4 = sld [smem:[#allocation0]]
  $region26: #{tpu_custom_call.1} parent=0
    _
  %s6 = ssub.s32 1, %s4
  %s7 = scalar_select 0, %s6, %s4
  $region1: #{tpu_custom_call.1} parent=0
    #allocation2 [shape = 'u8[100352]{0}', space=vmem, size = 0x18800, scoped, tag = 'input window, operand 1, single buffered']
    #allocation3 [shape = 's32[1]{0}', space=sflag, size = 0x4, scoped, tag = 'scoped memory for tpu_custom_call.1']
    #allocation4 [shape = 's32[1]{0}', space=sflag, size = 0x4, scoped, tag = 'scoped memory for tpu_custom_call.1']
    #allocation5 [shape = 'u8[8192]{0}', space=vmem, size = 0x2000, scoped, tag = 'output window, operand 0, single buffered']
    %8 = vsyncpa [#allocation3], 0
    %9 = vsyncpa [#allocation4], 0
    // Predicated region
    $region2: #{tpu_custom_call.1} parent=1 // pred_check
      _
    $region3: #{tpu_custom_call.1} parent=1 // pred_check_branch
      %11 = sbr.rel (0) target = $region5
    $region4: #{tpu_custom_call.1} parent=1 // pred_region
      _
    $region5: #{tpu_custom_call.1} parent=1 // pred_fallthru
      _
    // Predicated region
    $region6: #{tpu_custom_call.1} parent=1 // pred_check
      _
    $region7: #{tpu_custom_call.1} parent=1 // pred_check_branch
      %13 = sbr.rel (0) target = $region9
    $region8: #{tpu_custom_call.1} parent=1 // pred_region
      %s15 = ssub.s32 3136, 3136
      %16 = vsyncadd [#allocation3], %s15
      %s17 = sshll.u32 [#allocation2], 4
      %s18 = int_to_ptr.vmem [resolvable:$true] %s17
      %23 = dma.hbm_to_vmem [thread:$0]  %s1, 3136, %s18, [#allocation3], 64, 64, 4
    $region9: #{tpu_custom_call.1} parent=1 // pred_fallthru
      _
    // Predicated region
    $region10: #{tpu_custom_call.1} parent=1 // pred_check
      _
    $region11: #{tpu_custom_call.1} parent=1 // pred_check_branch
      %25 = sbr.rel (0) target = $region13
    $region12: #{tpu_custom_call.1} parent=1 // pred_region
      _
    $region13: #{tpu_custom_call.1} parent=1 // pred_fallthru
      _
    // Predicated region
    $region14: #{tpu_custom_call.1} parent=1 // pred_check
      _
    $region15: #{tpu_custom_call.1} parent=1 // pred_check_branch
      %27 = sbr.rel (0) target = $region17
    $region16: #{tpu_custom_call.1} parent=1 // pred_region
      %28 = dma.done [#allocation3], 3136
    $region17: #{tpu_custom_call.1} parent=1 // pred_fallthru
      _
    %v30 = vld [vmem:[%s2] sm:$0xf]
    %v31 = vld [vmem:[%s0] sm:$0xf]
    %v32 = vld [vmem:[%s0 + $0x4] sm:$0xf]
    %v33 = vld [vmem:[%s0 + $0x8] sm:$0xf]
    %v34 = vld [vmem:[%s0 + $0xc] sm:$0xf]
    %v35 = vld [vmem:[%s0 + $0x10] sm:$0xf]
    %v36 = vld [vmem:[%s0 + $0x14] sm:$0xf]
    %v37 = vld [vmem:[%s0 + $0x18] sm:$0xf]
    %v38 = vld [vmem:[%s0 + $0x1c] sm:$0xf]
    %v39 = vld [vmem:[%s0 + $0x20] sm:$0xf]
    %v40 = vld [vmem:[%s0 + $0x24] sm:$0xf]
    %v41 = vld [vmem:[%s0 + $0x28] sm:$0xf]
    %v42 = vld [vmem:[%s0 + $0x2c] sm:$0xf]
    %v43 = vld [vmem:[%s0 + $0x30] sm:$0xf]
    %v44 = vld [vmem:[%s0 + $0x34] sm:$0xf]
    %v45 = vld [vmem:[%s0 + $0x38] sm:$0xf]
    %v46 = vld [vmem:[%s0 + $0x3c] sm:$0xf]
    %v47 = vld [vmem:[#allocation2] sm:$0xf]
    %v48 = vlaneseq
    %v49 = vshrl.u32 %v48, 7
    %v50 = vsub.s32 0, %v49
    %v51 = vrot.slane %v30, %v50
    %v68 = vunpack.c.l.b16 %v31
    %v69 = vunpack.c.l.b16 %v32
    %v70 = vunpack.c.l.b16 %v33
    %v71 = vunpack.c.l.b16 %v34
    %v72 = vunpack.c.l.b16 %v35
    %v73 = vunpack.c.l.b16 %v36
    %v74 = vunpack.c.l.b16 %v37
    %v75 = vunpack.c.l.b16 %v38
    %v76 = vunpack.c.l.b16 %v39
    %v77 = vunpack.c.l.b16 %v40
    %v78 = vunpack.c.l.b16 %v41
    %v79 = vunpack.c.l.b16 %v42
    %v80 = vunpack.c.l.b16 %v43
    %v81 = vunpack.c.l.b16 %v44
    %v82 = vunpack.c.l.b16 %v45
    %v83 = vunpack.c.l.b16 %v46
    %v84 = vpack.c.b16 %v69, %v68
    %v85 = vpack.c.b16 %v71, %v70
    %v86 = vpack.c.b16 %v73, %v72
    %v87 = vpack.c.b16 %v75, %v74
    %v88 = vpack.c.b16 %v77, %v76
    %v89 = vpack.c.b16 %v79, %v78
    %v90 = vpack.c.b16 %v81, %v80
    %v91 = vpack.c.b16 %v83, %v82
    %vm92 = vcmask 64512
    %v94 = vsel %vm92, %v84, 0
    %v97 = vsel %vm92, %v85, 0
    %v100 = vsel %vm92, %v86, 0
    %v103 = vsel %vm92, %v87, 0
    %v106 = vsel %vm92, %v88, 0
    %v109 = vsel %vm92, %v89, 0
    %v112 = vsel %vm92, %v90, 0
    %v115 = vsel %vm92, %v91, 0
    %vm117 = vcmask 1043456
    %v119 = vsel %vm117, %v47, 0
    %121 = vmatprep.subr.bf16.mxu0 0
    %122 = vmatpush1.bf16.msra.mxu0 %v119
    %123 = vmatprep.subr.bf16.mxu0 0
    %124 = vmatpush1.bf16.msra.mxu0 0
    %125 = vmatprep.subr.bf16.mxu0 0
    %126 = vmatpush1.bf16.msra.mxu0 0
    %127 = vmatprep.subr.bf16.mxu0 0
    %128 = vmatpush1.bf16.msra.mxu0 0
    %129 = vmatprep.subr.bf16.mxu0 0
    %130 = vmatpush1.bf16.msra.mxu0 0
    %131 = vmatprep.subr.bf16.mxu0 0
    %132 = vmatpush1.bf16.msra.mxu0 0
    %133 = vmatprep.subr.bf16.mxu0 0
    %134 = vmatpush1.bf16.msra.mxu0 0
    %135 = vmatprep.subr.bf16.mxu0 0
    %136 = vmatpush1.bf16.msra.mxu0 0
    %137 = vmatprep.subr.bf16.mxu0 0
    %138 = vmatpush1.bf16.msra.mxu0 0
    %139 = vmatprep.subr.bf16.mxu0 0
    %140 = vmatpush1.bf16.msra.mxu0 0
    %141 = vmatprep.subr.bf16.mxu0 0
    %142 = vmatpush1.bf16.msra.mxu0 0
    %143 = vmatprep.subr.bf16.mxu0 0
    %144 = vmatpush1.bf16.msra.mxu0 0
    %145 = vmatprep.subr.bf16.mxu0 0
    %146 = vmatpush1.bf16.msra.mxu0 0
    %147 = vmatprep.subr.bf16.mxu0 0
    %148 = vmatpush1.bf16.msra.mxu0 0
    %149 = vmatprep.subr.bf16.mxu0 0
    %150 = vmatpush1.bf16.msra.mxu0 0
    %151 = vmatprep.subr.bf16.mxu0 0
    %152 = vmatpush1.bf16.msra.mxu0 0
    %153 = vmatprep.mubr.bf16.mxu0 0
    %154 = vmatmul.mubr.bf16.gmra.mrb[0].mxu0 %v94
    %v155 = vpop.f32.mrb[0].mxu0
    %v156 = vadd.f32 %v51, %v155
    %v157 = vpop.f32.mrb[0].mxu0
    %v158 = vpop.f32.mrb[0].mxu0
    %v159 = vadd.f32 %v51, %v158
    %v160 = vpop.f32.mrb[0].mxu0
    %161 = vmatprep.mubr.bf16.mxu0 0
    %162 = vmatmul.mubr.bf16.gmra.mrb[0].mxu0 %v97
    %v163 = vpop.f32.mrb[0].mxu0
    %v164 = vadd.f32 %v51, %v163
    %v165 = vpop.f32.mrb[0].mxu0
    %v166 = vpop.f32.mrb[0].mxu0
    %v167 = vadd.f32 %v51, %v166
    %v168 = vpop.f32.mrb[0].mxu0
    %169 = vmatprep.mubr.bf16.mxu0 0
    %170 = vmatmul.mubr.bf16.gmra.mrb[0].mxu0 %v100
    %v171 = vpop.f32.mrb[0].mxu0
    %v172 = vadd.f32 %v51, %v171
    %v173 = vpop.f32.mrb[0].mxu0
    %v174 = vpop.f32.mrb[0].mxu0
    %v175 = vadd.f32 %v51, %v174
    %v176 = vpop.f32.mrb[0].mxu0
    %177 = vmatprep.mubr.bf16.mxu0 0
    %178 = vmatmul.mubr.bf16.gmra.mrb[0].mxu0 %v103
    %v179 = vpop.f32.mrb[0].mxu0
    %v180 = vadd.f32 %v51, %v179
    %v181 = vpop.f32.mrb[0].mxu0
    %v182 = vpop.f32.mrb[0].mxu0
    %v183 = vadd.f32 %v51, %v182
    %v184 = vpop.f32.mrb[0].mxu0
    %185 = vmatprep.mubr.bf16.mxu0 0
    %186 = vmatmul.mubr.bf16.gmra.mrb[0].mxu0 %v106
    %v187 = vpop.f32.mrb[0].mxu0
    %v188 = vadd.f32 %v51, %v187
    %v189 = vpop.f32.mrb[0].mxu0
    %v190 = vpop.f32.mrb[0].mxu0
    %v191 = vadd.f32 %v51, %v190
    %v192 = vpop.f32.mrb[0].mxu0
    %193 = vmatprep.mubr.bf16.mxu0 0
    %194 = vmatmul.mubr.bf16.gmra.mrb[0].mxu0 %v109
    %v195 = vpop.f32.mrb[0].mxu0
    %v196 = vadd.f32 %v51, %v195
    %v197 = vpop.f32.mrb[0].mxu0
    %v198 = vpop.f32.mrb[0].mxu0
    %v199 = vadd.f32 %v51, %v198
    %v200 = vpop.f32.mrb[0].mxu0
    %201 = vmatprep.mubr.bf16.mxu0 0
    %202 = vmatmul.mubr.bf16.gmra.mrb[0].mxu0 %v112
    %v203 = vpop.f32.mrb[0].mxu0
    %v204 = vadd.f32 %v51, %v203
    %v205 = vpop.f32.mrb[0].mxu0
    %v206 = vpop.f32.mrb[0].mxu0
    %v207 = vadd.f32 %v51, %v206
    %v208 = vpop.f32.mrb[0].mxu0
    %209 = vmatprep.mubr.bf16.mxu0 0
    %210 = vmatmul.mubr.bf16.gmra.mrb[0].mxu0 %v115
    %v211 = vpop.f32.mrb[0].mxu0
    %v212 = vadd.f32 %v51, %v211
    %v213 = vpop.f32.mrb[0].mxu0
    %v214 = vpop.f32.mrb[0].mxu0
    %v215 = vadd.f32 %v51, %v214
    %v216 = vpop.f32.mrb[0].mxu0
    %217 = vdwg.mxu0
    %v218 = vmax.f32 %v156, 0.0
    %v219 = vmax.f32 %v159, 0.0
    %v220 = vmax.f32 %v164, 0.0
    %v221 = vmax.f32 %v167, 0.0
    %v222 = vmax.f32 %v172, 0.0
    %v223 = vmax.f32 %v175, 0.0
    %v224 = vmax.f32 %v180, 0.0
    %v225 = vmax.f32 %v183, 0.0
    %v226 = vmax.f32 %v188, 0.0
    %v227 = vmax.f32 %v191, 0.0
    %v228 = vmax.f32 %v196, 0.0
    %v229 = vmax.f32 %v199, 0.0
    %v230 = vmax.f32 %v204, 0.0
    %v231 = vmax.f32 %v207, 0.0
    %v232 = vmax.f32 %v212, 0.0
    %v233 = vmax.f32 %v215, 0.0
    %v234 = vpack.c.bf16 %v219, %v218
    %v235 = vpack.c.bf16 %v221, %v220
    %v236 = vpack.c.bf16 %v223, %v222
    %v237 = vpack.c.bf16 %v225, %v224
    %v238 = vpack.c.bf16 %v227, %v226
    %v239 = vpack.c.bf16 %v229, %v228
    %v240 = vpack.c.bf16 %v231, %v230
    %v241 = vpack.c.bf16 %v233, %v232
    %v242 = vld [vmem:[#allocation2 + $0x4] sm:$0xf]
    %v243 = vld [vmem:[#allocation2 + $0x8] sm:$0xf]
    %v244 = vld [vmem:[#allocation2 + $0xc] sm:$0xf]
    %v245 = vld [vmem:[#allocation2 + $0x10] sm:$0xf]
    %v246 = vld [vmem:[#allocation2 + $0x14] sm:$0xf]
    %v247 = vld [vmem:[#allocation2 + $0x18] sm:$0xf]
    %v248 = vld [vmem:[#allocation2 + $0x1c] sm:$0xf]
    %v249 = vld [vmem:[#allocation2 + $0x20] sm:$0xf]
    %v250 = vld [vmem:[#allocation2 + $0x24] sm:$0xf]
    %v251 = vld [vmem:[#allocation2 + $0x28] sm:$0xf]
    %v252 = vld [vmem:[#allocation2 + $0x2c] sm:$0xf]
    %v253 = vld [vmem:[#allocation2 + $0x30] sm:$0xf]
    %v254 = vld [vmem:[#allocation2 + $0x34] sm:$0xf]
    %v255 = vld [vmem:[#allocation2 + $0x38] sm:$0xf]
    %v256 = vld [vmem:[#allocation2 + $0x3c] sm:$0xf]
    %v257 = vld [vmem:[#allocation2 + $0x40] sm:$0xf]
    %v258 = vlaneseq
    %v259 = vshrl.u32 %v258, 7
    %v260 = vsub.s32 1, %v259
    %v261 = vrot.slane %v30, %v260
    %v278 = vunpack.c.l.b16 %v242
    %v279 = vunpack.c.l.b16 %v243
    %v280 = vunpack.c.l.b16 %v244
    %v281 = vunpack.c.l.b16 %v245
    %v282 = vunpack.c.l.b16 %v246
    %v283 = vunpack.c.l.b16 %v247
    %v284 = vunpack.c.l.b16 %v248
    %v285 = vunpack.c.l.b16 %v249
    %v286 = vunpack.c.l.b16 %v250
    %v287 = vunpack.c.l.b16 %v251
    %v288 = vunpack.c.l.b16 %v252
    %v289 = vunpack.c.l.b16 %v253
    %v290 = vunpack.c.l.b16 %v254
    %v291 = vunpack.c.l.b16 %v255
    %v292 = vunpack.c.l.b16 %v256
    %v293 = vunpack.c.l.b16 %v257
    %v294 = vpack.c.b16 %v279, %v278
    %v295 = vpack.c.b16 %v281, %v280
    %v296 = vpack.c.b16 %v283, %v282
    %v297 = vpack.c.b16 %v285, %v284
    %v298 = vpack.c.b16 %v287, %v286
    %v299 = vpack.c.b16 %v289, %v288
    %v300 = vpack.c.b16 %v291, %v290
    %v301 = vpack.c.b16 %v293, %v292
    %310 = vmatprep.subr.bf16.mxu0 0
    %311 = vmatpush1.bf16.msra.mxu0 %v294
    %312 = vmatprep.subr.bf16.mxu0 0
    %313 = vmatpush1.bf16.msra.mxu0 %v295
    %314 = vmatprep.subr.bf16.mxu0 0
    %315 = vmatpush1.bf16.msra.mxu0 %v296
    %316 = vmatprep.subr.bf16.mxu0 0
    %317 = vmatpush1.bf16.msra.mxu0 %v297
    %318 = vmatprep.subr.bf16.mxu0 0
    %319 = vmatpush1.bf16.msra.mxu0 %v298
    %320 = vmatprep.subr.bf16.mxu0 0
    %321 = vmatpush1.bf16.msra.mxu0 %v299
    %322 = vmatprep.subr.bf16.mxu0 0
    %323 = vmatpush1.bf16.msra.mxu0 %v300
    %324 = vmatprep.subr.bf16.mxu0 0
    %325 = vmatpush1.bf16.msra.mxu0 %v301
    %326 = vmatprep.subr.bf16.mxu0 0
    %327 = vmatpush1.bf16.msra.mxu0 0
    %328 = vmatprep.subr.bf16.mxu0 0
    %329 = vmatpush1.bf16.msra.mxu0 0
    %330 = vmatprep.subr.bf16.mxu0 0
    %331 = vmatpush1.bf16.msra.mxu0 0
    %332 = vmatprep.subr.bf16.mxu0 0
    %333 = vmatpush1.bf16.msra.mxu0 0
    %334 = vmatprep.subr.bf16.mxu0 0
    %335 = vmatpush1.bf16.msra.mxu0 0
    %336 = vmatprep.subr.bf16.mxu0 0
    %337 = vmatpush1.bf16.msra.mxu0 0
    %338 = vmatprep.subr.bf16.mxu0 0
    %339 = vmatpush1.bf16.msra.mxu0 0
    %340 = vmatprep.subr.bf16.mxu0 0
    %341 = vmatpush1.bf16.msra.mxu0 0
    %342 = vmatprep.mubr.bf16.mxu0 0
    %343 = vmatmul.mubr.bf16.gmra.mrb[0].mxu0 %v234
    %v344 = vpop.f32.mrb[0].mxu0
    %v345 = vadd.f32 %v261, %v344
    %v346 = vpop.f32.mrb[0].mxu0
    %v347 = vpop.f32.mrb[0].mxu0
    %v348 = vadd.f32 %v261, %v347
    %v349 = vpop.f32.mrb[0].mxu0
    %350 = vmatprep.mubr.bf16.mxu0 0
    %351 = vmatmul.mubr.bf16.gmra.mrb[0].mxu0 %v235
    %v352 = vpop.f32.mrb[0].mxu0
    %v353 = vadd.f32 %v261, %v352
    %v354 = vpop.f32.mrb[0].mxu0
    %v355 = vpop.f32.mrb[0].mxu0
    %v356 = vadd.f32 %v261, %v355
    %v357 = vpop.f32.mrb[0].mxu0
    %358 = vmatprep.mubr.bf16.mxu0 0
    %359 = vmatmul.mubr.bf16.gmra.mrb[0].mxu0 %v236
    %v360 = vpop.f32.mrb[0].mxu0
    %v361 = vadd.f32 %v261, %v360
    %v362 = vpop.f32.mrb[0].mxu0
    %v363 = vpop.f32.mrb[0].mxu0
    %v364 = vadd.f32 %v261, %v363
    %v365 = vpop.f32.mrb[0].mxu0
    %366 = vmatprep.mubr.bf16.mxu0 0
    %367 = vmatmul.mubr.bf16.gmra.mrb[0].mxu0 %v237
    %v368 = vpop.f32.mrb[0].mxu0
    %v369 = vadd.f32 %v261, %v368
    %v370 = vpop.f32.mrb[0].mxu0
    %v371 = vpop.f32.mrb[0].mxu0
    %v372 = vadd.f32 %v261, %v371
    %v373 = vpop.f32.mrb[0].mxu0
    %374 = vmatprep.mubr.bf16.mxu0 0
    %375 = vmatmul.mubr.bf16.gmra.mrb[0].mxu0 %v238
    %v376 = vpop.f32.mrb[0].mxu0
    %v377 = vadd.f32 %v261, %v376
    %v378 = vpop.f32.mrb[0].mxu0
    %v379 = vpop.f32.mrb[0].mxu0
    %v380 = vadd.f32 %v261, %v379
    %v381 = vpop.f32.mrb[0].mxu0
    %382 = vmatprep.mubr.bf16.mxu0 0
    %383 = vmatmul.mubr.bf16.gmra.mrb[0].mxu0 %v239
    %v384 = vpop.f32.mrb[0].mxu0
    %v385 = vadd.f32 %v261, %v384
    %v386 = vpop.f32.mrb[0].mxu0
    %v387 = vpop.f32.mrb[0].mxu0
    %v388 = vadd.f32 %v261, %v387
    %v389 = vpop.f32.mrb[0].mxu0
    %390 = vmatprep.mubr.bf16.mxu0 0
    %391 = vmatmul.mubr.bf16.gmra.mrb[0].mxu0 %v240
    %v392 = vpop.f32.mrb[0].mxu0
    %v393 = vadd.f32 %v261, %v392
    %v394 = vpop.f32.mrb[0].mxu0
    %v395 = vpop.f32.mrb[0].mxu0
    %v396 = vadd.f32 %v261, %v395
    %v397 = vpop.f32.mrb[0].mxu0
    %398 = vmatprep.mubr.bf16.mxu0 0
    %399 = vmatmul.mubr.bf16.gmra.mrb[0].mxu0 %v241
    %v400 = vpop.f32.mrb[0].mxu0
    %v401 = vadd.f32 %v261, %v400
    %v402 = vpop.f32.mrb[0].mxu0
    %v403 = vpop.f32.mrb[0].mxu0
    %v404 = vadd.f32 %v261, %v403
    %v405 = vpop.f32.mrb[0].mxu0
    %406 = vdwg.mxu0
    %v407 = vmax.f32 %v345, 0.0
    %v408 = vmax.f32 %v348, 0.0
    %v409 = vmax.f32 %v353, 0.0
    %v410 = vmax.f32 %v356, 0.0
    %v411 = vmax.f32 %v361, 0.0
    %v412 = vmax.f32 %v364, 0.0
    %v413 = vmax.f32 %v369, 0.0
    %v414 = vmax.f32 %v372, 0.0
    %v415 = vmax.f32 %v377, 0.0
    %v416 = vmax.f32 %v380, 0.0
    %v417 = vmax.f32 %v385, 0.0
    %v418 = vmax.f32 %v388, 0.0
    %v419 = vmax.f32 %v393, 0.0
    %v420 = vmax.f32 %v396, 0.0
    %v421 = vmax.f32 %v401, 0.0
    %v422 = vmax.f32 %v404, 0.0
    %v423 = vpack.c.bf16 %v408, %v407
    %v424 = vpack.c.bf16 %v410, %v409
    %v425 = vpack.c.bf16 %v412, %v411
    %v426 = vpack.c.bf16 %v414, %v413
    %v427 = vpack.c.bf16 %v416, %v415
    %v428 = vpack.c.bf16 %v418, %v417
    %v429 = vpack.c.bf16 %v420, %v419
    %v430 = vpack.c.bf16 %v422, %v421
    %v431 = vld [vmem:[#allocation2 + $0x44] sm:$0xf]
    %v432 = vld [vmem:[#allocation2 + $0x48] sm:$0xf]
    %v433 = vld [vmem:[#allocation2 + $0x4c] sm:$0xf]
    %v434 = vld [vmem:[#allocation2 + $0x50] sm:$0xf]
    %v435 = vld [vmem:[#allocation2 + $0x54] sm:$0xf]
    %v436 = vld [vmem:[#allocation2 + $0x58] sm:$0xf]
    %v437 = vld [vmem:[#allocation2 + $0x5c] sm:$0xf]
    %v438 = vld [vmem:[#allocation2 + $0x60] sm:$0xf]
    %v439 = vld [vmem:[#allocation2 + $0x64] sm:$0xf]
    %v440 = vld [vmem:[#allocation2 + $0x68] sm:$0xf]
    %v441 = vld [vmem:[#allocation2 + $0x6c] sm:$0xf]
    %v442 = vld [vmem:[#allocation2 + $0x70] sm:$0xf]
    %v443 = vld [vmem:[#allocation2 + $0x74] sm:$0xf]
    %v444 = vld [vmem:[#allocation2 + $0x78] sm:$0xf]
    %v445 = vld [vmem:[#allocation2 + $0x7c] sm:$0xf]
    %v446 = vld [vmem:[#allocation2 + $0x80] sm:$0xf]
    %v447 = vlaneseq
    %v448 = vshrl.u32 %v447, 7
    %v449 = vsub.s32 2, %v448
    %v450 = vrot.slane %v30, %v449
    %v467 = vunpack.c.l.b16 %v431
    %v468 = vunpack.c.l.b16 %v432
    %v469 = vunpack.c.l.b16 %v433
    %v470 = vunpack.c.l.b16 %v434
    %v471 = vunpack.c.l.b16 %v435
    %v472 = vunpack.c.l.b16 %v436
    %v473 = vunpack.c.l.b16 %v437
    %v474 = vunpack.c.l.b16 %v438
    %v475 = vunpack.c.l.b16 %v439
    %v476 = vunpack.c.l.b16 %v440
    %v477 = vunpack.c.l.b16 %v441
    %v478 = vunpack.c.l.b16 %v442
    %v479 = vunpack.c.l.b16 %v443
    %v480 = vunpack.c.l.b16 %v444
    %v481 = vunpack.c.l.b16 %v445
    %v482 = vunpack.c.l.b16 %v446
    %v483 = vpack.c.b16 %v468, %v467
    %v484 = vpack.c.b16 %v470, %v469
    %v485 = vpack.c.b16 %v472, %v471
    %v486 = vpack.c.b16 %v474, %v473
    %v487 = vpack.c.b16 %v476, %v475
    %v488 = vpack.c.b16 %v478, %v477
    %v489 = vpack.c.b16 %v480, %v479
    %v490 = vpack.c.b16 %v482, %v481
    %499 = vmatprep.subr.bf16.mxu0 0
    %500 = vmatpush1.bf16.msra.mxu0 %v483
    %501 = vmatprep.subr.bf16.mxu0 0
    %502 = vmatpush1.bf16.msra.mxu0 %v484
    %503 = vmatprep.subr.bf16.mxu0 0
    %504 = vmatpush1.bf16.msra.mxu0 %v485
    %505 = vmatprep.subr.bf16.mxu0 0
    %506 = vmatpush1.bf16.msra.mxu0 %v486
    %507 = vmatprep.subr.bf16.mxu0 0
    %508 = vmatpush1.bf16.msra.mxu0 %v487
    %509 = vmatprep.subr.bf16.mxu0 0
    %510 = vmatpush1.bf16.msra.mxu0 %v488
    %511 = vmatprep.subr.bf16.mxu0 0
    %512 = vmatpush1.bf16.msra.mxu0 %v489
    %513 = vmatprep.subr.bf16.mxu0 0
    %514 = vmatpush1.bf16.msra.mxu0 %v490
    %515 = vmatprep.subr.bf16.mxu0 0
    %516 = vmatpush1.bf16.msra.mxu0 0
    %517 = vmatprep.subr.bf16.mxu0 0
    %518 = vmatpush1.bf16.msra.mxu0 0
    %519 = vmatprep.subr.bf16.mxu0 0
    %520 = vmatpush1.bf16.msra.mxu0 0
    %521 = vmatprep.subr.bf16.mxu0 0
    %522 = vmatpush1.bf16.msra.mxu0 0
    %523 = vmatprep.subr.bf16.mxu0 0
    %524 = vmatpush1.bf16.msra.mxu0 0
    %525 = vmatprep.subr.bf16.mxu0 0
    %526 = vmatpush1.bf16.msra.mxu0 0
    %527 = vmatprep.subr.bf16.mxu0 0
    %528 = vmatpush1.bf16.msra.mxu0 0
    %529 = vmatprep.subr.bf16.mxu0 0
    %530 = vmatpush1.bf16.msra.mxu0 0
    %531 = vmatprep.mubr.bf16.mxu0 0
    %532 = vmatmul.mubr.bf16.gmra.mrb[0].mxu0 %v423
    %v533 = vpop.f32.mrb[0].mxu0
    %v534 = vadd.f32 %v450, %v533
    %v535 = vpop.f32.mrb[0].mxu0
    %v536 = vpop.f32.mrb[0].mxu0
    %v537 = vadd.f32 %v450, %v536
    %v538 = vpop.f32.mrb[0].mxu0
    %539 = vmatprep.mubr.bf16.mxu0 0
    %540 = vmatmul.mubr.bf16.gmra.mrb[0].mxu0 %v424
    %v541 = vpop.f32.mrb[0].mxu0
    %v542 = vadd.f32 %v450, %v541
    %v543 = vpop.f32.mrb[0].mxu0
    %v544 = vpop.f32.mrb[0].mxu0
    %v545 = vadd.f32 %v450, %v544
    %v546 = vpop.f32.mrb[0].mxu0
    %547 = vmatprep.mubr.bf16.mxu0 0
    %548 = vmatmul.mubr.bf16.gmra.mrb[0].mxu0 %v425
    %v549 = vpop.f32.mrb[0].mxu0
    %v550 = vadd.f32 %v450, %v549
    %v551 = vpop.f32.mrb[0].mxu0
    %v552 = vpop.f32.mrb[0].mxu0
    %v553 = vadd.f32 %v450, %v552
    %v554 = vpop.f32.mrb[0].mxu0
    %555 = vmatprep.mubr.bf16.mxu0 0
    %556 = vmatmul.mubr.bf16.gmra.mrb[0].mxu0 %v426
    %v557 = vpop.f32.mrb[0].mxu0
    %v558 = vadd.f32 %v450, %v557
    %v559 = vpop.f32.mrb[0].mxu0
    %v560 = vpop.f32.mrb[0].mxu0
    %v561 = vadd.f32 %v450, %v560
    %v562 = vpop.f32.mrb[0].mxu0
    %563 = vmatprep.mubr.bf16.mxu0 0
    %564 = vmatmul.mubr.bf16.gmra.mrb[0].mxu0 %v427
    %v565 = vpop.f32.mrb[0].mxu0
    %v566 = vadd.f32 %v450, %v565
    %v567 = vpop.f32.mrb[0].mxu0
    %v568 = vpop.f32.mrb[0].mxu0
    %v569 = vadd.f32 %v450, %v568
    %v570 = vpop.f32.mrb[0].mxu0
    %571 = vmatprep.mubr.bf16.mxu0 0
    %572 = vmatmul.mubr.bf16.gmra.mrb[0].mxu0 %v428
    %v573 = vpop.f32.mrb[0].mxu0
    %v574 = vadd.f32 %v450, %v573
    %v575 = vpop.f32.mrb[0].mxu0
    %v576 = vpop.f32.mrb[0].mxu0
    %v577 = vadd.f32 %v450, %v576
    %v578 = vpop.f32.mrb[0].mxu0
    %579 = vmatprep.mubr.bf16.mxu0 0
    %580 = vmatmul.mubr.bf16.gmra.mrb[0].mxu0 %v429
    %v581 = vpop.f32.mrb[0].mxu0
    %v582 = vadd.f32 %v450, %v581
    %v583 = vpop.f32.mrb[0].mxu0
    %v584 = vpop.f32.mrb[0].mxu0
    %v585 = vadd.f32 %v450, %v584
    %v586 = vpop.f32.mrb[0].mxu0
    %587 = vmatprep.mubr.bf16.mxu0 0
    %588 = vmatmul.mubr.bf16.gmra.mrb[0].mxu0 %v430
    %v589 = vpop.f32.mrb[0].mxu0
    %v590 = vadd.f32 %v450, %v589
    %v591 = vpop.f32.mrb[0].mxu0
    %v592 = vpop.f32.mrb[0].mxu0
    %v593 = vadd.f32 %v450, %v592
    %v594 = vpop.f32.mrb[0].mxu0
    %595 = vdwg.mxu0
    %v596 = vmax.f32 %v534, 0.0
    %v597 = vmax.f32 %v537, 0.0
    %v598 = vmax.f32 %v542, 0.0
    %v599 = vmax.f32 %v545, 0.0
    %v600 = vmax.f32 %v550, 0.0
    %v601 = vmax.f32 %v553, 0.0
    %v602 = vmax.f32 %v558, 0.0
    %v603 = vmax.f32 %v561, 0.0
    %v604 = vmax.f32 %v566, 0.0
    %v605 = vmax.f32 %v569, 0.0
    %v606 = vmax.f32 %v574, 0.0
    %v607 = vmax.f32 %v577, 0.0
    %v608 = vmax.f32 %v582, 0.0
    %v609 = vmax.f32 %v585, 0.0
    %v610 = vmax.f32 %v590, 0.0
    %v611 = vmax.f32 %v593, 0.0
    %v612 = vrot.slane %v596, 4
    %v613 = vadd.f32 %v596, %v612
    %v614 = vrot.slane %v613, 2
    %v615 = vadd.f32 %v613, %v614
    %v616 = vrot.slane %v615, 1
    %v617 = vadd.f32 %v615, %v616
    %v618 = vrot.slane %v597, 4
    %v619 = vadd.f32 %v597, %v618
    %v620 = vrot.slane %v619, 2
    %v621 = vadd.f32 %v619, %v620
    %v622 = vrot.slane %v621, 1
    %v623 = vadd.f32 %v621, %v622
    %v624 = vrot.slane %v598, 4
    %v625 = vadd.f32 %v598, %v624
    %v626 = vrot.slane %v625, 2
    %v627 = vadd.f32 %v625, %v626
    %v628 = vrot.slane %v627, 1
    %v629 = vadd.f32 %v627, %v628
    %v630 = vrot.slane %v599, 4
    %v631 = vadd.f32 %v599, %v630
    %v632 = vrot.slane %v631, 2
    %v633 = vadd.f32 %v631, %v632
    %v634 = vrot.slane %v633, 1
    %v635 = vadd.f32 %v633, %v634
    %v636 = vrot.slane %v600, 4
    %v637 = vadd.f32 %v600, %v636
    %v638 = vrot.slane %v637, 2
    %v639 = vadd.f32 %v637, %v638
    %v640 = vrot.slane %v639, 1
    %v641 = vadd.f32 %v639, %v640
    %v642 = vrot.slane %v601, 4
    %v643 = vadd.f32 %v601, %v642
    %v644 = vrot.slane %v643, 2
    %v645 = vadd.f32 %v643, %v644
    %v646 = vrot.slane %v645, 1
    %v647 = vadd.f32 %v645, %v646
    %v648 = vrot.slane %v602, 4
    %v649 = vadd.f32 %v602, %v648
    %v650 = vrot.slane %v649, 2
    %v651 = vadd.f32 %v649, %v650
    %v652 = vrot.slane %v651, 1
    %v653 = vadd.f32 %v651, %v652
    %v654 = vrot.slane %v603, 4
    %v655 = vadd.f32 %v603, %v654
    %v656 = vrot.slane %v655, 2
    %v657 = vadd.f32 %v655, %v656
    %v658 = vrot.slane %v657, 1
    %v659 = vadd.f32 %v657, %v658
    %v660 = vrot.slane %v604, 4
    %v661 = vadd.f32 %v604, %v660
    %v662 = vrot.slane %v661, 2
    %v663 = vadd.f32 %v661, %v662
    %v664 = vrot.slane %v663, 1
    %v665 = vadd.f32 %v663, %v664
    %v666 = vrot.slane %v605, 4
    %v667 = vadd.f32 %v605, %v666
    %v668 = vrot.slane %v667, 2
    %v669 = vadd.f32 %v667, %v668
    %v670 = vrot.slane %v669, 1
    %v671 = vadd.f32 %v669, %v670
    %v672 = vrot.slane %v606, 4
    %v673 = vadd.f32 %v606, %v672
    %v674 = vrot.slane %v673, 2
    %v675 = vadd.f32 %v673, %v674
    %v676 = vrot.slane %v675, 1
    %v677 = vadd.f32 %v675, %v676
    %v678 = vrot.slane %v607, 4
    %v679 = vadd.f32 %v607, %v678
    %v680 = vrot.slane %v679, 2
    %v681 = vadd.f32 %v679, %v680
    %v682 = vrot.slane %v681, 1
    %v683 = vadd.f32 %v681, %v682
    %v684 = vrot.slane %v608, 4
    %v685 = vadd.f32 %v608, %v684
    %v686 = vrot.slane %v685, 2
    %v687 = vadd.f32 %v685, %v686
    %v688 = vrot.slane %v687, 1
    %v689 = vadd.f32 %v687, %v688
    %v690 = vrot.slane %v609, 4
    %v691 = vadd.f32 %v609, %v690
    %v692 = vrot.slane %v691, 2
    %v693 = vadd.f32 %v691, %v692
    %v694 = vrot.slane %v693, 1
    %v695 = vadd.f32 %v693, %v694
    %v696 = vrot.slane %v610, 4
    %v697 = vadd.f32 %v610, %v696
    %v698 = vrot.slane %v697, 2
    %v699 = vadd.f32 %v697, %v698
    %v700 = vrot.slane %v699, 1
    %v701 = vadd.f32 %v699, %v700
    %v702 = vrot.slane %v611, 4
    %v703 = vadd.f32 %v611, %v702
    %v704 = vrot.slane %v703, 2
    %v705 = vadd.f32 %v703, %v704
    %v706 = vrot.slane %v705, 1
    %v707 = vadd.f32 %v705, %v706
    %v708 = vrcp.pop 8.0
    %v709 = vmul.f32 %v617, %v708
    %v710 = vmul.f32 %v623, %v708
    %v711 = vmul.f32 %v629, %v708
    %v712 = vmul.f32 %v635, %v708
    %v713 = vmul.f32 %v641, %v708
    %v714 = vmul.f32 %v647, %v708
    %v715 = vmul.f32 %v653, %v708
    %v716 = vmul.f32 %v659, %v708
    %v717 = vmul.f32 %v665, %v708
    %v718 = vmul.f32 %v671, %v708
    %v719 = vmul.f32 %v677, %v708
    %v720 = vmul.f32 %v683, %v708
    %v721 = vmul.f32 %v689, %v708
    %v722 = vmul.f32 %v695, %v708
    %v723 = vmul.f32 %v701, %v708
    %v724 = vmul.f32 %v707, %v708
    %v725 = vpack.c.bf16 %v709, %v709
    %v726 = vpack.c.bf16 %v710, %v710
    %v727 = vpack.c.bf16 %v711, %v711
    %v728 = vpack.c.bf16 %v712, %v712
    %v729 = vpack.c.bf16 %v713, %v713
    %v730 = vpack.c.bf16 %v714, %v714
    %v731 = vpack.c.bf16 %v715, %v715
    %v732 = vpack.c.bf16 %v716, %v716
    %v733 = vpack.c.bf16 %v717, %v717
    %v734 = vpack.c.bf16 %v718, %v718
    %v735 = vpack.c.bf16 %v719, %v719
    %v736 = vpack.c.bf16 %v720, %v720
    %v737 = vpack.c.bf16 %v721, %v721
    %v738 = vpack.c.bf16 %v722, %v722
    %v739 = vpack.c.bf16 %v723, %v723
    %v740 = vpack.c.bf16 %v724, %v724
    %v741 = vld [vmem:[#allocation2 + $0x84] sm:$0xf]
    %v742 = vld [vmem:[#allocation2 + $0x88] sm:$0xf]
    %v743 = vld [vmem:[#allocation2 + $0x8c] sm:$0xf]
    %v744 = vld [vmem:[#allocation2 + $0x90] sm:$0xf]
    %v745 = vld [vmem:[#allocation2 + $0x94] sm:$0xf]
    %v746 = vld [vmem:[#allocation2 + $0x98] sm:$0xf]
    %v747 = vld [vmem:[#allocation2 + $0x9c] sm:$0xf]
    %v748 = vld [vmem:[#allocation2 + $0xa0] sm:$0xf]
    %v749 = vld [vmem:[#allocation2 + $0xa4] sm:$0xf]
    %v750 = vld [vmem:[#allocation2 + $0xa8] sm:$0xf]
    %v751 = vld [vmem:[#allocation2 + $0xac] sm:$0xf]
    %v752 = vld [vmem:[#allocation2 + $0xb0] sm:$0xf]
    %v753 = vld [vmem:[#allocation2 + $0xb4] sm:$0xf]
    %v754 = vld [vmem:[#allocation2 + $0xb8] sm:$0xf]
    %v755 = vld [vmem:[#allocation2 + $0xbc] sm:$0xf]
    %v756 = vld [vmem:[#allocation2 + $0xc0] sm:$0xf]
    %v757 = vlaneseq
    %v758 = vshrl.u32 %v757, 7
    %v759 = vsub.s32 3, %v758
    %v760 = vrot.slane %v30, %v759
    %v777 = vunpack.c.l.b16 %v725
    %v778 = vunpack.c.l.b16 %v726
    %v779 = vunpack.c.l.b16 %v727
    %v780 = vunpack.c.l.b16 %v728
    %v781 = vunpack.c.l.b16 %v729
    %v782 = vunpack.c.l.b16 %v730
    %v783 = vunpack.c.l.b16 %v731
    %v784 = vunpack.c.l.b16 %v732
    %v785 = vunpack.c.l.b16 %v733
    %v786 = vunpack.c.l.b16 %v734
    %v787 = vunpack.c.l.b16 %v735
    %v788 = vunpack.c.l.b16 %v736
    %v789 = vunpack.c.l.b16 %v737
    %v790 = vunpack.c.l.b16 %v738
    %v791 = vunpack.c.l.b16 %v739
    %v792 = vunpack.c.l.b16 %v740
    %vm793 = vcmask 1041409
    %v794 = vsel %vm793, %v778, %v777
    %vm795 = vcmask 1042434
    %v796 = vsel %vm795, %v779, %v794
    %vm797 = vcmask 1043459
    %v798 = vsel %vm797, %v780, %v796
    %vm799 = vcmask 1044484
    %v800 = vsel %vm799, %v781, %v798
    %vm801 = vcmask 1045509
    %v802 = vsel %vm801, %v782, %v800
    %vm803 = vcmask 1046534
    %v804 = vsel %vm803, %v783, %v802
    %vm805 = vcmask 1047559
    %v806 = vsel %vm805, %v784, %v804
    %v807 = vsel %vm793, %v786, %v785
    %v808 = vsel %vm795, %v787, %v807
    %v809 = vsel %vm797, %v788, %v808
    %v810 = vsel %vm799, %v789, %v809
    %v811 = vsel %vm801, %v790, %v810
    %v812 = vsel %vm803, %v791, %v811
    %v813 = vsel %vm805, %v792, %v812
    %v814 = vpack.c.b16 %v813, %v806
    %v832 = vunpack.c.l.b16 %v741
    %v833 = vunpack.c.l.b16 %v742
    %v834 = vunpack.c.l.b16 %v743
    %v835 = vunpack.c.l.b16 %v744
    %v836 = vunpack.c.l.b16 %v745
    %v837 = vunpack.c.l.b16 %v746
    %v838 = vunpack.c.l.b16 %v747
    %v839 = vunpack.c.l.b16 %v748
    %v840 = vunpack.c.l.b16 %v749
    %v841 = vunpack.c.l.b16 %v750
    %v842 = vunpack.c.l.b16 %v751
    %v843 = vunpack.c.l.b16 %v752
    %v844 = vunpack.c.l.b16 %v753
    %v845 = vunpack.c.l.b16 %v754
    %v846 = vunpack.c.l.b16 %v755
    %v847 = vunpack.c.l.b16 %v756
    %v848 = vpack.c.b16 %v833, %v832
    %v849 = vpack.c.b16 %v835, %v834
    %v850 = vpack.c.b16 %v837, %v836
    %v851 = vpack.c.b16 %v839, %v838
    %v852 = vpack.c.b16 %v841, %v840
    %v853 = vpack.c.b16 %v843, %v842
    %v854 = vpack.c.b16 %v845, %v844
    %v855 = vpack.c.b16 %v847, %v846
    %864 = vmatprep.subr.bf16.mxu0 0
    %865 = vmatpush1.bf16.msra.mxu0 %v848
    %866 = vmatprep.subr.bf16.mxu0 0
    %867 = vmatpush1.bf16.msra.mxu0 %v849
    %868 = vmatprep.subr.bf16.mxu0 0
    %869 = vmatpush1.bf16.msra.mxu0 %v850
    %870 = vmatprep.subr.bf16.mxu0 0
    %871 = vmatpush1.bf16.msra.mxu0 %v851
    %872 = vmatprep.subr.bf16.mxu0 0
    %873 = vmatpush1.bf16.msra.mxu0 %v852
    %874 = vmatprep.subr.bf16.mxu0 0
    %875 = vmatpush1.bf16.msra.mxu0 %v853
    %876 = vmatprep.subr.bf16.mxu0 0
    %877 = vmatpush1.bf16.msra.mxu0 %v854
    %878 = vmatprep.subr.bf16.mxu0 0
    %879 = vmatpush1.bf16.msra.mxu0 %v855
    %880 = vmatprep.subr.bf16.mxu0 0
    %881 = vmatpush1.bf16.msra.mxu0 0
    %882 = vmatprep.subr.bf16.mxu0 0
    %883 = vmatpush1.bf16.msra.mxu0 0
    %884 = vmatprep.subr.bf16.mxu0 0
    %885 = vmatpush1.bf16.msra.mxu0 0
    %886 = vmatprep.subr.bf16.mxu0 0
    %887 = vmatpush1.bf16.msra.mxu0 0
    %888 = vmatprep.subr.bf16.mxu0 0
    %889 = vmatpush1.bf16.msra.mxu0 0
    %890 = vmatprep.subr.bf16.mxu0 0
    %891 = vmatpush1.bf16.msra.mxu0 0
    %892 = vmatprep.subr.bf16.mxu0 0
    %893 = vmatpush1.bf16.msra.mxu0 0
    %894 = vmatprep.subr.bf16.mxu0 0
    %895 = vmatpush1.bf16.msra.mxu0 0
    %896 = vmatprep.mubr.bf16.mxu0 0
    %897 = vmatmul.mubr.bf16.gmra.mrb[0].mxu0 %v814
    %v898 = vpop.f32.mrb[0].mxu0
    %v899 = vadd.f32 %v760, %v898
    %v900 = vpop.f32.mrb[0].mxu0
    %v901 = vpop.f32.mrb[0].mxu0
    %v902 = vadd.f32 %v760, %v901
    %v903 = vpop.f32.mrb[0].mxu0
    %904 = vdwg.mxu0
    %905 = vst [vmem:[#allocation5] sm:$0xff] %v899
    %906 = vst [vmem:[#allocation5 + $0x8] sm:$0xff] %v902
    // Predicated region
    $region18: #{tpu_custom_call.1} parent=1 // pred_check
      _
    $region19: #{tpu_custom_call.1} parent=1 // pred_check_branch
      %908 = sbr.rel (0) target = $region21
    $region20: #{tpu_custom_call.1} parent=1 // pred_region
      %s910 = ssub.s32 256, 256
      %911 = vsyncadd [#allocation4], %s910
      %s912 = sshll.u32 [#allocation5], 4
      %s913 = int_to_ptr.vmem [resolvable:$true] %s912
      %918 = dma.vmem_to_hbm [thread:$0]  %s913, 256, %s3, [#allocation4], 128, 128, 8
    $region21: #{tpu_custom_call.1} parent=1 // pred_fallthru
      _
    // Predicated region
    $region22: #{tpu_custom_call.1} parent=1 // pred_check
      _
    $region23: #{tpu_custom_call.1} parent=1 // pred_check_branch
      %920 = sbr.rel (0) target = $region25
    $region24: #{tpu_custom_call.1} parent=1 // pred_region
      %921 = dma.done [#allocation4], 256
    $region25: #{tpu_custom_call.1} parent=1 // pred_fallthru
      _
    %922 = vsyncpa [#allocation3], 1
    %923 = vsyncpa [#allocation4], 1

</llo_original>
